<compile_context>
chip_gen: v6e
topology: v6e:2x2x1
jax: 0.10.0
libtpu: 0.0.40
codegen_flags: <defaults>
</compile_context>

<pallas_src>
import functools

import numpy as np

import jax
import jax.numpy as jnp
from jax import lax
from jax.experimental import pallas as pl
from jax.experimental.pallas import tpu as pltpu


# ----------------------------- Pallas kernel --------------------------------

def _bottleneck_kernel(x_ref, masks_ref, w1_ref, b1_ref, w2_ref, b2_ref,
                       w3_ref, b3_ref, o_ref, *, img_w, mp):
    """Fused Bottleneck forward for one image.

    Channel-first layout, flattened UNPADDED spatial grid on the lane axis:
      x_ref    : (1, C0, Mp)      Mp = ceil(H*W / 128) * 128 (== H*W here)
      masks_ref: (9, 1, Mp)       per-tap validity masks for conv2 (pad=1)
      w1_ref   : (C1, C0)         conv1 weight * bn1 scale
      w2_ref   : (C2, 9*C1)       conv2 weight * bn2 scale, taps flattened on K
      w3_ref   : (C0, C2)         conv3 weight * bn3 scale
      b*_ref   : (C, 1)           folded BN biases
      o_ref    : (1, C0, Mp)
    """
    x = x_ref[0]                                     # (C0, Mp)  lane-dense

    # conv1 (1x1) + bn1 + relu
    o1 = jnp.dot(w1_ref[...], x, preferred_element_type=jnp.float32) + b1_ref[...]
    o1 = jnp.maximum(o1, 0.0)                        # (C1, Mp)

    # conv2 (3x3, pad=1, stride=1): build 9 shifted+masked taps, then a single
    # K = 9*C1 matmul.  A spatial offset (dh, dw) is a lane shift d = dh*W + dw
    # (XLU roll); the per-tap mask zeroes exactly the positions whose shifted
    # read would cross a row / image boundary, reproducing the zero padding.
    taps = []
    k = 0
    for dh in (-1, 0, 1):
        for dw in (-1, 0, 1):
            d = dh * img_w + dw
            if d == 0:
                tap = o1                              # center tap: always valid
            else:
                tap = pltpu.roll(o1, (-d) % mp, axis=1)   # tap[:,p] = o1[:,p+d]
                tap = tap * masks_ref[k]              # (1, Mp) broadcast
            taps.append(tap)
            k += 1
    taps = jnp.concatenate(taps, axis=0)              # (9*C1, Mp)

    o2 = jnp.dot(w2_ref[...], taps, preferred_element_type=jnp.float32) + b2_ref[...]
    o2 = jnp.maximum(o2, 0.0)                         # (C2, Mp)

    # conv3 (1x1) + bn3 + identity residual + relu
    o3 = jnp.dot(w3_ref[...], o2, preferred_element_type=jnp.float32) \
         + b3_ref[...] + x
    o_ref[0] = jnp.maximum(o3, 0.0).astype(o_ref.dtype)


# --------------------------- one-time param prep ------------------------------

def _fold_bn(gamma, beta, mean, var, eps=1e-5):
    scale = gamma / jnp.sqrt(var + eps)
    bias = beta - mean * scale
    return scale.astype(jnp.float32), bias.astype(jnp.float32)


def _tap_masks(h, w, mp):
    """(9, 1, Mp) f32 masks: mask[k, 0, p]=1 iff tap k at position p is valid."""
    m = h * w
    hh, ww = np.meshgrid(np.arange(h), np.arange(w), indexing="ij")
    masks = np.zeros((9, 1, mp), np.float32)
    k = 0
    for dh in (-1, 0, 1):
        for dw in (-1, 0, 1):
            valid = ((hh + dh >= 0) & (hh + dh < h) &
                     (ww + dw >= 0) & (ww + dw < w))
            masks[k, 0, :m] = valid.reshape(-1)
            k += 1
    return jnp.asarray(masks)


def prepare_bottleneck(params, h, w):
    """Fold BN scales into conv weights, flatten conv2 weight for the single
    K=9*C1 matmul, and precompute the conv2 tap masks (done once per model)."""
    s1, b1 = _fold_bn(*params["bn1"])
    s2, b2 = _fold_bn(*params["bn2"])
    s3, b3 = _fold_bn(*params["bn3"])
    C1 = params["w1"].shape[0]
    C2 = params["w2"].shape[0]
    C0 = params["w3"].shape[0]

    w1_eff = (params["w1"][:, :, 0, 0] * s1[:, None]).astype(jnp.float32)    # (C1, C0)
    # (C2, C1, 3, 3) -> (C2, 3, 3, C1) -> (C2, 9*C1); tap k = (dh+1)*3+(dw+1)
    w2_eff = jnp.transpose(params["w2"] * s2[:, None, None, None],
                           (0, 2, 3, 1)).reshape(C2, 9 * C1).astype(jnp.float32)
    w3_eff = (params["w3"][:, :, 0, 0] * s3[:, None]).astype(jnp.float32)    # (C0, C2)

    m = h * w
    mp = ((m + 127) // 128) * 128     # lane-dense flattened spatial axis
    return dict(
        w1=w1_eff, b1=b1.reshape(C1, 1),
        w2=w2_eff, b2=b2.reshape(C2, 1),
        w3=w3_eff, b3=b3.reshape(C0, 1),
        masks=_tap_masks(h, w, mp),
        mp=mp, c0=C0, c1=C1, c2=C2,
    )


# ------------------------------- forward --------------------------------------

def bottleneck_forward(x_nchw, prep, stride=1):
    """Pallas Bottleneck.forward for the downsample=None / cfg_bef=None branch."""
    assert stride == 1, "only the stride=1 identity-residual branch is implemented"
    # TODO(synk): the downsample / cfg_bef / stride>1 branches of Bottleneck are
    # config variants not instantiated here.

    N, C0, H, W = x_nchw.shape
    M = H * W
    Mp, C1, C2 = prep["mp"], prep["c1"], prep["c2"]

    # NCHW is channel-major already; collapsing (H, W) -> M is a free reshape.
    x_flat = x_nchw.astype(jnp.float32).reshape(N, C0, M)
    if Mp != M:          # not taken for 16x16 images (M = 256 = 2*128)
        x_flat = jnp.pad(x_flat, ((0, 0), (0, 0), (0, Mp - M)))

    kernel = functools.partial(_bottleneck_kernel, img_w=W, mp=Mp)
    out_flat = pl.pallas_call(
        kernel,
        out_shape=jax.ShapeDtypeStruct((N, C0, Mp), jnp.float32),
        grid=(N,),
        in_specs=[
            pl.BlockSpec((1, C0, Mp), lambda n: (n, 0, 0)),      # x (per image)
            pl.BlockSpec((9, 1, Mp), lambda n: (0, 0, 0)),       # conv2 tap masks
            pl.BlockSpec((C1, C0), lambda n: (0, 0)),            # w1 * s1
            pl.BlockSpec((C1, 1), lambda n: (0, 0)),             # b1
            pl.BlockSpec((C2, 9 * C1), lambda n: (0, 0)),        # flattened w2 * s2
            pl.BlockSpec((C2, 1), lambda n: (0, 0)),             # b2
            pl.BlockSpec((C0, C2), lambda n: (0, 0)),            # w3 * s3
            pl.BlockSpec((C0, 1), lambda n: (0, 0)),             # b3
        ],
        out_specs=pl.BlockSpec((1, C0, Mp), lambda n: (n, 0, 0)),
        compiler_params=pltpu.CompilerParams(
            dimension_semantics=("parallel",)),
    )(x_flat, prep["masks"], prep["w1"], prep["b1"], prep["w2"], prep["b2"],
      prep["w3"], prep["b3"])

    if Mp != M:
        out_flat = out_flat[:, :, :M]
    return out_flat.reshape(N, C0, H, W)


# ------------------------- pure-JAX reference check --------------------------

def _bn_ref(x_nhwc, gamma, beta, mean, var, eps=1e-5):
    return (x_nhwc - mean) / jnp.sqrt(var + eps) * gamma + beta


def bottleneck_ref(x_nchw, params, stride=1):
    x = jnp.transpose(x_nchw, (0, 2, 3, 1)).astype(jnp.float32)  # NHWC
    dn = lax.conv_dimension_numbers(x.shape, (1, 1, 1, 1), ("NHWC", "HWIO", "NHWC"))

    w1 = jnp.transpose(params["w1"], (2, 3, 1, 0))  # HWIO
    o = lax.conv_general_dilated(x, w1, (1, 1), "VALID", dimension_numbers=dn)
    o = jnp.maximum(_bn_ref(o, *params["bn1"]), 0.0)

    w2 = jnp.transpose(params["w2"], (2, 3, 1, 0))
    o = lax.conv_general_dilated(o, w2, (stride, stride), ((1, 1), (1, 1)),
                                 dimension_numbers=dn)
    o = jnp.maximum(_bn_ref(o, *params["bn2"]), 0.0)

    w3 = jnp.transpose(params["w3"], (2, 3, 1, 0))
    o = lax.conv_general_dilated(o, w3, (1, 1), "VALID", dimension_numbers=dn)
    o = _bn_ref(o, *params["bn3"])

    o = jnp.maximum(o + x, 0.0)
    return jnp.transpose(o, (0, 3, 1, 2))


# ---------------------------------- main -------------------------------------

if __name__ == "__main__":
    # cfg = [inplanes, planes_mid1, planes_mid2, out_when_downsample]
    cfg = [16, 8, 8, 64]
    C0, C1, C2 = cfg[0], cfg[1], cfg[2]
    N, H, W = 2, 16, 16
    stride = 1

    key = jax.random.PRNGKey(0)
    ks = jax.random.split(key, 16)

    def bn_params(kg, kb, km, kv, c):
        gamma = 0.5 + jax.random.uniform(kg, (c,), jnp.float32)
        beta = 0.1 * jax.random.normal(kb, (c,), jnp.float32)
        mean = 0.1 * jax.random.normal(km, (c,), jnp.float32)
        var = 0.5 + jax.random.uniform(kv, (c,), jnp.float32)
        return (gamma, beta, mean, var)

    params = {
        # conv weights kept in PyTorch layout (Cout, Cin, kh, kw)
        "w1": 0.1 * jax.random.normal(ks[0], (C1, C0, 1, 1), jnp.float32),
        "w2": 0.1 * jax.random.normal(ks[1], (C2, C1, 3, 3), jnp.float32),
        "w3": 0.1 * jax.random.normal(ks[2], (C0, C2, 1, 1), jnp.float32),
        "bn1": bn_params(ks[3], ks[4], ks[5], ks[6], C1),
        "bn2": bn_params(ks[7], ks[8], ks[9], ks[10], C2),
        "bn3": bn_params(ks[11], ks[12], ks[13], ks[14], C0),
    }

    x = jax.random.normal(ks[15], (N, C0, H, W), jnp.float32)  # NCHW like PyTorch

    prep = prepare_bottleneck(params, H, W)        # one-time parameter folding
    out = jax.block_until_ready(bottleneck_forward(x, prep, stride=stride))

    ref = jax.block_until_ready(bottleneck_ref(x, params, stride=stride))
    assert out.shape == (N, C0, H, W), out.shape
    err = float(jnp.max(jnp.abs(out - ref)))
    assert jnp.allclose(out, ref, atol=1e-4, rtol=1e-4), err

    print("KERNEL_OK")
</pallas_src>

<mosaic_0001>
module attributes {stable_mosaic.version = 11 : i64} {
  func.func @_bottleneck_kernel(%arg0: i32, %arg1: memref<1x16x256xf32, #tpu.memory_space<vmem>>, %arg2: memref<9x1x256xf32, #tpu.memory_space<vmem>>, %arg3: memref<8x16xf32, #tpu.memory_space<vmem>>, %arg4: memref<8x1xf32, #tpu.memory_space<vmem>>, %arg5: memref<8x72xf32, #tpu.memory_space<vmem>>, %arg6: memref<8x1xf32, #tpu.memory_space<vmem>>, %arg7: memref<16x8xf32, #tpu.memory_space<vmem>>, %arg8: memref<16x1xf32, #tpu.memory_space<vmem>>, %arg9: memref<1x16x256xf32, #tpu.memory_space<vmem>>) attributes {dimension_semantics = [#tpu.dimension_semantics<parallel>], iteration_bounds = array<i64: 2>, scalar_prefetch = 0 : i64, scratch_operands = 0 : i64, tpu.core_type = #tpu.core_type<tc>, window_params = [{transform_indices = @transform_0, window_bounds = array<i64: 1, 16, 256>}, {pipeline_mode = #tpu.pipeline_mode<synchronous>, transform_indices = @transform_1, window_bounds = array<i64: 9, 1, 256>}, {pipeline_mode = #tpu.pipeline_mode<synchronous>, transform_indices = @transform_2, window_bounds = array<i64: 8, 16>}, {pipeline_mode = #tpu.pipeline_mode<synchronous>, transform_indices = @transform_3, window_bounds = array<i64: 8, 1>}, {pipeline_mode = #tpu.pipeline_mode<synchronous>, transform_indices = @transform_4, window_bounds = array<i64: 8, 72>}, {pipeline_mode = #tpu.pipeline_mode<synchronous>, transform_indices = @transform_5, window_bounds = array<i64: 8, 1>}, {pipeline_mode = #tpu.pipeline_mode<synchronous>, transform_indices = @transform_6, window_bounds = array<i64: 16, 8>}, {pipeline_mode = #tpu.pipeline_mode<synchronous>, transform_indices = @transform_7, window_bounds = array<i64: 16, 1>}, {transform_indices = @transform_8, window_bounds = array<i64: 1, 16, 256>}]} {
    %c0 = arith.constant 0 : index
    %c0_0 = arith.constant 0 : index
    %c0_1 = arith.constant 0 : index
    %0 = vector.load %arg1[%c0, %c0_0, %c0_1] : memref<1x16x256xf32, #tpu.memory_space<vmem>>, vector<1x16x256xf32>
    %1 = vector.shape_cast %0 : vector<1x16x256xf32> to vector<16x256xf32>
    %c0_2 = arith.constant 0 : index
    %c0_3 = arith.constant 0 : index
    %2 = vector.load %arg3[%c0_2, %c0_3] : memref<8x16xf32, #tpu.memory_space<vmem>>, vector<8x16xf32>
    %cst = arith.constant dense<0.000000e+00> : vector<8x256xf32>
    %3 = tpu.matmul %2, %1, %cst {dimension_numbers = #tpu.dot_dimension_numbers<[1], [0], [0], [1], [0, 0, 1, 1], [], []>} : vector<8x16xf32>, vector<16x256xf32>, vector<8x256xf32> -> vector<8x256xf32>
    %c0_4 = arith.constant 0 : index
    %c0_5 = arith.constant 0 : index
    %4 = vector.load %arg4[%c0_4, %c0_5] : memref<8x1xf32, #tpu.memory_space<vmem>>, vector<8x1xf32>
    %5 = vector.broadcast %4 : vector<8x1xf32> to vector<8x256xf32>
    %6 = arith.addf %3, %5 : vector<8x256xf32>
    %cst_6 = arith.constant 0.000000e+00 : f32
    %7 = vector.broadcast %cst_6 : f32 to vector<8x256xf32>
    %8 = arith.maximumf %6, %7 : vector<8x256xf32>
    %c17_i32 = arith.constant 17 : i32
    %9 = tpu.dynamic_rotate %8 by %c17_i32 dim 1 : vector<8x256xf32>, i32 -> vector<8x256xf32>
    %c0_7 = arith.constant 0 : index
    %c0_8 = arith.constant 0 : index
    %c0_9 = arith.constant 0 : index
    %10 = vector.load %arg2[%c0_7, %c0_8, %c0_9] : memref<9x1x256xf32, #tpu.memory_space<vmem>>, vector<1x1x256xf32>
    %11 = vector.shape_cast %10 : vector<1x1x256xf32> to vector<1x256xf32>
    %12 = vector.broadcast %11 : vector<1x256xf32> to vector<8x256xf32>
    %13 = arith.mulf %9, %12 : vector<8x256xf32>
    %c16_i32 = arith.constant 16 : i32
    %14 = tpu.dynamic_rotate %8 by %c16_i32 dim 1 : vector<8x256xf32>, i32 -> vector<8x256xf32>
    %c1 = arith.constant 1 : index
    %c0_10 = arith.constant 0 : index
    %c0_11 = arith.constant 0 : index
    %15 = vector.load %arg2[%c1, %c0_10, %c0_11] : memref<9x1x256xf32, #tpu.memory_space<vmem>>, vector<1x1x256xf32>
    %16 = vector.shape_cast %15 : vector<1x1x256xf32> to vector<1x256xf32>
    %17 = vector.broadcast %16 : vector<1x256xf32> to vector<8x256xf32>
    %18 = arith.mulf %14, %17 : vector<8x256xf32>
    %c15_i32 = arith.constant 15 : i32
    %19 = tpu.dynamic_rotate %8 by %c15_i32 dim 1 : vector<8x256xf32>, i32 -> vector<8x256xf32>
    %c2 = arith.constant 2 : index
    %c0_12 = arith.constant 0 : index
    %c0_13 = arith.constant 0 : index
    %20 = vector.load %arg2[%c2, %c0_12, %c0_13] : memref<9x1x256xf32, #tpu.memory_space<vmem>>, vector<1x1x256xf32>
    %21 = vector.shape_cast %20 : vector<1x1x256xf32> to vector<1x256xf32>
    %22 = vector.broadcast %21 : vector<1x256xf32> to vector<8x256xf32>
    %23 = arith.mulf %19, %22 : vector<8x256xf32>
    %c1_i32 = arith.constant 1 : i32
    %24 = tpu.dynamic_rotate %8 by %c1_i32 dim 1 : vector<8x256xf32>, i32 -> vector<8x256xf32>
    %c3 = arith.constant 3 : index
    %c0_14 = arith.constant 0 : index
    %c0_15 = arith.constant 0 : index
    %25 = vector.load %arg2[%c3, %c0_14, %c0_15] : memref<9x1x256xf32, #tpu.memory_space<vmem>>, vector<1x1x256xf32>
    %26 = vector.shape_cast %25 : vector<1x1x256xf32> to vector<1x256xf32>
    %27 = vector.broadcast %26 : vector<1x256xf32> to vector<8x256xf32>
    %28 = arith.mulf %24, %27 : vector<8x256xf32>
    %c255_i32 = arith.constant 255 : i32
    %29 = tpu.dynamic_rotate %8 by %c255_i32 dim 1 : vector<8x256xf32>, i32 -> vector<8x256xf32>
    %c5 = arith.constant 5 : index
    %c0_16 = arith.constant 0 : index
    %c0_17 = arith.constant 0 : index
    %30 = vector.load %arg2[%c5, %c0_16, %c0_17] : memref<9x1x256xf32, #tpu.memory_space<vmem>>, vector<1x1x256xf32>
    %31 = vector.shape_cast %30 : vector<1x1x256xf32> to vector<1x256xf32>
    %32 = vector.broadcast %31 : vector<1x256xf32> to vector<8x256xf32>
    %33 = arith.mulf %29, %32 : vector<8x256xf32>
    %c241_i32 = arith.constant 241 : i32
    %34 = tpu.dynamic_rotate %8 by %c241_i32 dim 1 : vector<8x256xf32>, i32 -> vector<8x256xf32>
    %c6 = arith.constant 6 : index
    %c0_18 = arith.constant 0 : index
    %c0_19 = arith.constant 0 : index
    %35 = vector.load %arg2[%c6, %c0_18, %c0_19] : memref<9x1x256xf32, #tpu.memory_space<vmem>>, vector<1x1x256xf32>
    %36 = vector.shape_cast %35 : vector<1x1x256xf32> to vector<1x256xf32>
    %37 = vector.broadcast %36 : vector<1x256xf32> to vector<8x256xf32>
    %38 = arith.mulf %34, %37 : vector<8x256xf32>
    %c240_i32 = arith.constant 240 : i32
    %39 = tpu.dynamic_rotate %8 by %c240_i32 dim 1 : vector<8x256xf32>, i32 -> vector<8x256xf32>
    %c7 = arith.constant 7 : index
    %c0_20 = arith.constant 0 : index
    %c0_21 = arith.constant 0 : index
    %40 = vector.load %arg2[%c7, %c0_20, %c0_21] : memref<9x1x256xf32, #tpu.memory_space<vmem>>, vector<1x1x256xf32>
    %41 = vector.shape_cast %40 : vector<1x1x256xf32> to vector<1x256xf32>
    %42 = vector.broadcast %41 : vector<1x256xf32> to vector<8x256xf32>
    %43 = arith.mulf %39, %42 : vector<8x256xf32>
    %c239_i32 = arith.constant 239 : i32
    %44 = tpu.dynamic_rotate %8 by %c239_i32 dim 1 : vector<8x256xf32>, i32 -> vector<8x256xf32>
    %c8 = arith.constant 8 : index
    %c0_22 = arith.constant 0 : index
    %c0_23 = arith.constant 0 : index
    %45 = vector.load %arg2[%c8, %c0_22, %c0_23] : memref<9x1x256xf32, #tpu.memory_space<vmem>>, vector<1x1x256xf32>
    %46 = vector.shape_cast %45 : vector<1x1x256xf32> to vector<1x256xf32>
    %47 = vector.broadcast %46 : vector<1x256xf32> to vector<8x256xf32>
    %48 = arith.mulf %44, %47 : vector<8x256xf32>
    %49 = tpu.concatenate %13, %18, %23, %28, %8, %33, %38, %43, %48 in 0 : vector<8x256xf32>, vector<8x256xf32>, vector<8x256xf32>, vector<8x256xf32>, vector<8x256xf32>, vector<8x256xf32>, vector<8x256xf32>, vector<8x256xf32>, vector<8x256xf32> -> vector<72x256xf32>
    %c0_24 = arith.constant 0 : index
    %c0_25 = arith.constant 0 : index
    %50 = vector.load %arg5[%c0_24, %c0_25] : memref<8x72xf32, #tpu.memory_space<vmem>>, vector<8x72xf32>
    %cst_26 = arith.constant dense<0.000000e+00> : vector<8x256xf32>
    %51 = tpu.matmul %50, %49, %cst_26 {dimension_numbers = #tpu.dot_dimension_numbers<[1], [0], [0], [1], [0, 0, 1, 1], [], []>} : vector<8x72xf32>, vector<72x256xf32>, vector<8x256xf32> -> vector<8x256xf32>
    %c0_27 = arith.constant 0 : index
    %c0_28 = arith.constant 0 : index
    %52 = vector.load %arg6[%c0_27, %c0_28] : memref<8x1xf32, #tpu.memory_space<vmem>>, vector<8x1xf32>
    %53 = vector.broadcast %52 : vector<8x1xf32> to vector<8x256xf32>
    %54 = arith.addf %51, %53 : vector<8x256xf32>
    %cst_29 = arith.constant 0.000000e+00 : f32
    %55 = vector.broadcast %cst_29 : f32 to vector<8x256xf32>
    %56 = arith.maximumf %54, %55 : vector<8x256xf32>
    %c0_30 = arith.constant 0 : index
    %c0_31 = arith.constant 0 : index
    %57 = vector.load %arg7[%c0_30, %c0_31] : memref<16x8xf32, #tpu.memory_space<vmem>>, vector<16x8xf32>
    %cst_32 = arith.constant dense<0.000000e+00> : vector<16x256xf32>
    %58 = tpu.matmul %57, %56, %cst_32 {dimension_numbers = #tpu.dot_dimension_numbers<[1], [0], [0], [1], [0, 0, 1, 1], [], []>} : vector<16x8xf32>, vector<8x256xf32>, vector<16x256xf32> -> vector<16x256xf32>
    %c0_33 = arith.constant 0 : index
    %c0_34 = arith.constant 0 : index
    %59 = vector.load %arg8[%c0_33, %c0_34] : memref<16x1xf32, #tpu.memory_space<vmem>>, vector<16x1xf32>
    %60 = vector.broadcast %59 : vector<16x1xf32> to vector<16x256xf32>
    %61 = arith.addf %58, %60 : vector<16x256xf32>
    %62 = arith.addf %61, %1 : vector<16x256xf32>
    %cst_35 = arith.constant 0.000000e+00 : f32
    %63 = vector.broadcast %cst_35 : f32 to vector<16x256xf32>
    %64 = arith.maximumf %62, %63 : vector<16x256xf32>
    %c0_36 = arith.constant 0 : index
    %c0_37 = arith.constant 0 : index
    %c0_38 = arith.constant 0 : index
    %65 = vector.load %arg9[%c0_36, %c0_37, %c0_38] : memref<1x16x256xf32, #tpu.memory_space<vmem>>, vector<1x16x256xf32>
    %66 = vector.shape_cast %65 : vector<1x16x256xf32> to vector<16x256xf32>
    %67 = vector.shape_cast %64 : vector<16x256xf32> to vector<1x16x256xf32>
    tpu.vector_store %arg9[%c0_36, %c0_37, %c0_38], %67 {strides = array<i32>} : memref<1x16x256xf32, #tpu.memory_space<vmem>>, vector<1x16x256xf32>,
    return
  }
  func.func @transform_0(%arg0: i32) -> (i32, i32, i32) {
    %c0_i32 = arith.constant 0 : i32
    %c0_i32_0 = arith.constant 0 : i32
    %c0_i32_1 = arith.constant 0 : i32
    return %arg0, %c0_i32, %c0_i32_0 : i32, i32, i32
  }
  func.func @transform_1(%arg0: i32) -> (i32, i32, i32) {
    %c0_i32 = arith.constant 0 : i32
    %c0_i32_0 = arith.constant 0 : i32
    %c0_i32_1 = arith.constant 0 : i32
    %c0_i32_2 = arith.constant 0 : i32
    return %c0_i32, %c0_i32_0, %c0_i32_1 : i32, i32, i32
  }
  func.func @transform_2(%arg0: i32) -> (i32, i32) {
    %c0_i32 = arith.constant 0 : i32
    %c0_i32_0 = arith.constant 0 : i32
    %c0_i32_1 = arith.constant 0 : i32
    return %c0_i32, %c0_i32_0 : i32, i32
  }
  func.func @transform_3(%arg0: i32) -> (i32, i32) {
    %c0_i32 = arith.constant 0 : i32
    %c0_i32_0 = arith.constant 0 : i32
    %c0_i32_1 = arith.constant 0 : i32
    return %c0_i32, %c0_i32_0 : i32, i32
  }
  func.func @transform_4(%arg0: i32) -> (i32, i32) {
    %c0_i32 = arith.constant 0 : i32
    %c0_i32_0 = arith.constant 0 : i32
    %c0_i32_1 = arith.constant 0 : i32
    return %c0_i32, %c0_i32_0 : i32, i32
  }
  func.func @transform_5(%arg0: i32) -> (i32, i32) {
    %c0_i32 = arith.constant 0 : i32
    %c0_i32_0 = arith.constant 0 : i32
    %c0_i32_1 = arith.constant 0 : i32
    return %c0_i32, %c0_i32_0 : i32, i32
  }
  func.func @transform_6(%arg0: i32) -> (i32, i32) {
    %c0_i32 = arith.constant 0 : i32
    %c0_i32_0 = arith.constant 0 : i32
    %c0_i32_1 = arith.constant 0 : i32
    return %c0_i32, %c0_i32_0 : i32, i32
  }
  func.func @transform_7(%arg0: i32) -> (i32, i32) {
    %c0_i32 = arith.constant 0 : i32
    %c0_i32_0 = arith.constant 0 : i32
    %c0_i32_1 = arith.constant 0 : i32
    return %c0_i32, %c0_i32_0 : i32, i32
  }
  func.func @transform_8(%arg0: i32) -> (i32, i32, i32) {
    %c0_i32 = arith.constant 0 : i32
    %c0_i32_0 = arith.constant 0 : i32
    %c0_i32_1 = arith.constant 0 : i32
    return %arg0, %c0_i32, %c0_i32_0 : i32, i32, i32
  }
}

</mosaic_0001>

<llo_original>
// kernel: tpu_custom_call.1
$region0: #{tpu_custom_call.1}
  #allocation0 [shape = 'u32[]', space=smem, size = 0x4, offset = 0x4, fixed_abs, tag = 'smem constant byte address 0x4 - core index']
  #allocation1 [shape = 'u32[144,128]{1,0:T(1,128)}', space=vmem, size = 0x12000, scoped, tag = 'internal scratch']
  %s0 = inlined_call_operand.hbm [shape: f32[2,16,256], index: 0, kind: input, shape index: {}]
  %s1 = inlined_call_operand.vmem [shape: f32[9,1,256], index: 1, kind: input, shape index: {}]
  %s2 = inlined_call_operand.vmem [shape: f32[8,16], index: 2, kind: input, shape index: {}]
  %s3 = inlined_call_operand.vmem [shape: f32[8,1], index: 3, kind: input, shape index: {}]
  %s4 = inlined_call_operand.vmem [shape: f32[8,72], index: 4, kind: input, shape index: {}]
  %s5 = inlined_call_operand.vmem [shape: f32[8,1], index: 5, kind: input, shape index: {}]
  %s6 = inlined_call_operand.vmem [shape: f32[16,8], index: 6, kind: input, shape index: {}]
  %s7 = inlined_call_operand.vmem [shape: f32[16,1], index: 7, kind: input, shape index: {}]
  %s8 = inlined_call_operand.hbm [shape: f32[2,16,256], index: 8, kind: output, shape index: {}]
  %s9 = sld [smem:[#allocation0]]
  $region69: #{tpu_custom_call.1} parent=0
    _
  %s11 = ssub.s32 1, %s9
  %s12 = scalar_select 0, %s11, %s9
  $region1: #{tpu_custom_call.1} parent=0
    #allocation2 [shape = 'u8[32768]{0}', space=vmem, size = 0x8000, scoped, tag = 'input window, operand 0']
    #allocation3 [shape = 's32[2]{0}', space=sflag, size = 0x8, scoped, tag = 'scoped memory for tpu_custom_call.1']
    #allocation4 [shape = 's32[2]{0}', space=sflag, size = 0x8, scoped, tag = 'scoped memory for tpu_custom_call.1']
    #allocation5 [shape = 'u8[32768]{0}', space=vmem, size = 0x8000, scoped, tag = 'output window, operand 0']
    %13 = vsyncpa [#allocation3], 0
    %s14 = scalar_lea.sflag [#allocation3], 1
    %15 = vsyncpa %s14, 0
    %16 = vsyncpa [#allocation4], 0
    %s17 = scalar_lea.sflag [#allocation4], 1
    %18 = vsyncpa %s17, 0
    loop: start=0, step=1, limit=4
    $region2: #{tpu_custom_call.1} parent=1 // loop_pre_header
      _
    $region3: #{tpu_custom_call.1} parent=1 // loop_header
      %s20 = sphi 0, %s24
      %p21 = scmp.ge.s32.totalorder %s20, 4
      %s30 = sphi 0, %s32
      %s33 = sphi 0, %s30
      %s34 = sphi 0, %s33
      %s50 = sphi 0, %s34
      %s54 = sphi 0, %s54
      %s56 = sphi 0, %s54
      %s57 = sphi 0, %s56
      %s71 = sphi 0, %s57
      %s75 = sphi 0, %s75
      %s77 = sphi 0, %s75
      %s78 = sphi 0, %s77
      %s92 = sphi 0, %s78
      %s96 = sphi 0, %s96
      %s98 = sphi 0, %s96
      %s99 = sphi 0, %s98
      %s113 = sphi 0, %s99
      %s117 = sphi 0, %s117
      %s119 = sphi 0, %s117
      %s120 = sphi 0, %s119
      %s134 = sphi 0, %s120
      %s138 = sphi 0, %s138
      %s140 = sphi 0, %s138
      %s141 = sphi 0, %s140
      %s155 = sphi 0, %s141
      %s159 = sphi 0, %s159
      %s161 = sphi 0, %s159
      %s162 = sphi 0, %s161
      %s176 = sphi 0, %s162
      %s180 = sphi 0, %s180
      %s182 = sphi 0, %s180
      %s183 = sphi 0, %s182
      %s197 = sphi 0, %s183
      %s203 = sphi 0, %s205
      %s206 = sphi 0, %s203
      %s207 = sphi 0, %s206
      %s223 = sphi 0, %s207
    $region4: #{tpu_custom_call.1} parent=1 // loop_header_branch
      %23 = sbr.rel (%p21) target = $region8
    $region5: #{tpu_custom_call.1} parent=1 // loop_body
      %s25 = ssub.s32 %s20, 1
      %s26 = ssub.s32 %s20, 2
      %s27 = sadd.s32 %s20, 1
      %s28 = ssub.s32 %s20, %s27
      %p29 = scmp.eq.s32.totalorder %s28, 0
      %s31 = sadd.s32 %s30, 1
      %s32 = scalar_select %p29, %s30, %s31
      %p35 = pneg %p29
      %p36 = scmp.eq.s32.totalorder %s20, 1
      %p37 = por %p35, %p36
      %p38 = scmp.ne.s32.totalorder %s30, %s33
      %p39 = scmp.eq.s32.totalorder %s20, 0
      %p40 = por %p38, %p39
      %p41 = scmp.ne.s32.totalorder %s30, %s33
      %p42 = scmp.eq.s32.totalorder %s25, 1
      %p43 = por %p41, %p42
      %p44 = scmp.ne.s32.totalorder %s33, %s34
      %p45 = scmp.eq.s32.totalorder %s25, 0
      %p46 = por %p44, %p45
      %p47 = scmp.ne.s32.totalorder %s33, %s34
      %p48 = scmp.eq.s32.totalorder %s26, 1
      %p49 = por %p47, %p48
      %p51 = scmp.ne.s32.totalorder %s34, %s50
      %p52 = scmp.eq.s32.totalorder %s26, 0
      %p53 = por %p51, %p52
      %s55 = sadd.s32 %s54, 1
      %p58 = scmp.eq.s32.totalorder %s20, 1
      %p59 = scmp.ne.s32.totalorder %s54, %s56
      %p60 = scmp.eq.s32.totalorder %s20, 0
      %p61 = por %p59, %p60
      %p62 = scmp.ne.s32.totalorder %s54, %s56
      %p63 = scmp.eq.s32.totalorder %s25, 1
      %p64 = por %p62, %p63
      %p65 = scmp.ne.s32.totalorder %s56, %s57
      %p66 = scmp.eq.s32.totalorder %s25, 0
      %p67 = por %p65, %p66
      %p68 = scmp.ne.s32.totalorder %s56, %s57
      %p69 = scmp.eq.s32.totalorder %s26, 1
      %p70 = por %p68, %p69
      %p72 = scmp.ne.s32.totalorder %s57, %s71
      %p73 = scmp.eq.s32.totalorder %s26, 0
      %p74 = por %p72, %p73
      %s76 = sadd.s32 %s75, 1
      %p79 = scmp.eq.s32.totalorder %s20, 1
      %p80 = scmp.ne.s32.totalorder %s75, %s77
      %p81 = scmp.eq.s32.totalorder %s20, 0
      %p82 = por %p80, %p81
      %p83 = scmp.ne.s32.totalorder %s75, %s77
      %p84 = scmp.eq.s32.totalorder %s25, 1
      %p85 = por %p83, %p84
      %p86 = scmp.ne.s32.totalorder %s77, %s78
      %p87 = scmp.eq.s32.totalorder %s25, 0
      %p88 = por %p86, %p87
      %p89 = scmp.ne.s32.totalorder %s77, %s78
      %p90 = scmp.eq.s32.totalorder %s26, 1
      %p91 = por %p89, %p90
      %p93 = scmp.ne.s32.totalorder %s78, %s92
      %p94 = scmp.eq.s32.totalorder %s26, 0
      %p95 = por %p93, %p94
      %s97 = sadd.s32 %s96, 1
      %p100 = scmp.eq.s32.totalorder %s20, 1
      %p101 = scmp.ne.s32.totalorder %s96, %s98
      %p102 = scmp.eq.s32.totalorder %s20, 0
      %p103 = por %p101, %p102
      %p104 = scmp.ne.s32.totalorder %s96, %s98
      %p105 = scmp.eq.s32.totalorder %s25, 1
      %p106 = por %p104, %p105
      %p107 = scmp.ne.s32.totalorder %s98, %s99
      %p108 = scmp.eq.s32.totalorder %s25, 0
      %p109 = por %p107, %p108
      %p110 = scmp.ne.s32.totalorder %s98, %s99
      %p111 = scmp.eq.s32.totalorder %s26, 1
      %p112 = por %p110, %p111
      %p114 = scmp.ne.s32.totalorder %s99, %s113
      %p115 = scmp.eq.s32.totalorder %s26, 0
      %p116 = por %p114, %p115
      %s118 = sadd.s32 %s117, 1
      %p121 = scmp.eq.s32.totalorder %s20, 1
      %p122 = scmp.ne.s32.totalorder %s117, %s119
      %p123 = scmp.eq.s32.totalorder %s20, 0
      %p124 = por %p122, %p123
      %p125 = scmp.ne.s32.totalorder %s117, %s119
      %p126 = scmp.eq.s32.totalorder %s25, 1
      %p127 = por %p125, %p126
      %p128 = scmp.ne.s32.totalorder %s119, %s120
      %p129 = scmp.eq.s32.totalorder %s25, 0
      %p130 = por %p128, %p129
      %p131 = scmp.ne.s32.totalorder %s119, %s120
      %p132 = scmp.eq.s32.totalorder %s26, 1
      %p133 = por %p131, %p132
      %p135 = scmp.ne.s32.totalorder %s120, %s134
      %p136 = scmp.eq.s32.totalorder %s26, 0
      %p137 = por %p135, %p136
      %s139 = sadd.s32 %s138, 1
      %p142 = scmp.eq.s32.totalorder %s20, 1
      %p143 = scmp.ne.s32.totalorder %s138, %s140
      %p144 = scmp.eq.s32.totalorder %s20, 0
      %p145 = por %p143, %p144
      %p146 = scmp.ne.s32.totalorder %s138, %s140
      %p147 = scmp.eq.s32.totalorder %s25, 1
      %p148 = por %p146, %p147
      %p149 = scmp.ne.s32.totalorder %s140, %s141
      %p150 = scmp.eq.s32.totalorder %s25, 0
      %p151 = por %p149, %p150
      %p152 = scmp.ne.s32.totalorder %s140, %s141
      %p153 = scmp.eq.s32.totalorder %s26, 1
      %p154 = por %p152, %p153
      %p156 = scmp.ne.s32.totalorder %s141, %s155
      %p157 = scmp.eq.s32.totalorder %s26, 0
      %p158 = por %p156, %p157
      %s160 = sadd.s32 %s159, 1
      %p163 = scmp.eq.s32.totalorder %s20, 1
      %p164 = scmp.ne.s32.totalorder %s159, %s161
      %p165 = scmp.eq.s32.totalorder %s20, 0
      %p166 = por %p164, %p165
      %p167 = scmp.ne.s32.totalorder %s159, %s161
      %p168 = scmp.eq.s32.totalorder %s25, 1
      %p169 = por %p167, %p168
      %p170 = scmp.ne.s32.totalorder %s161, %s162
      %p171 = scmp.eq.s32.totalorder %s25, 0
      %p172 = por %p170, %p171
      %p173 = scmp.ne.s32.totalorder %s161, %s162
      %p174 = scmp.eq.s32.totalorder %s26, 1
      %p175 = por %p173, %p174
      %p177 = scmp.ne.s32.totalorder %s162, %s176
      %p178 = scmp.eq.s32.totalorder %s26, 0
      %p179 = por %p177, %p178
      %s181 = sadd.s32 %s180, 1
      %p184 = scmp.eq.s32.totalorder %s20, 1
      %p185 = scmp.ne.s32.totalorder %s180, %s182
      %p186 = scmp.eq.s32.totalorder %s20, 0
      %p187 = por %p185, %p186
      %p188 = scmp.ne.s32.totalorder %s180, %s182
      %p189 = scmp.eq.s32.totalorder %s25, 1
      %p190 = por %p188, %p189
      %p191 = scmp.ne.s32.totalorder %s182, %s183
      %p192 = scmp.eq.s32.totalorder %s25, 0
      %p193 = por %p191, %p192
      %p194 = scmp.ne.s32.totalorder %s182, %s183
      %p195 = scmp.eq.s32.totalorder %s26, 1
      %p196 = por %p194, %p195
      %p198 = scmp.ne.s32.totalorder %s183, %s197
      %p199 = scmp.eq.s32.totalorder %s26, 0
      %p200 = por %p198, %p199
      %s201 = ssub.s32 %s20, %s27
      %p202 = scmp.eq.s32.totalorder %s201, 0
      %s204 = sadd.s32 %s203, 1
      %s205 = scalar_select %p202, %s203, %s204
      %p208 = pneg %p202
      %p209 = scmp.eq.s32.totalorder %s20, 1
      %p210 = por %p208, %p209
      %p211 = scmp.ne.s32.totalorder %s203, %s206
      %p212 = scmp.eq.s32.totalorder %s20, 0
      %p213 = por %p211, %p212
      %p214 = scmp.ne.s32.totalorder %s203, %s206
      %p215 = scmp.eq.s32.totalorder %s25, 1
      %p216 = por %p214, %p215
      %p217 = scmp.ne.s32.totalorder %s206, %s207
      %p218 = scmp.eq.s32.totalorder %s25, 0
      %p219 = por %p217, %p218
      %p220 = scmp.ne.s32.totalorder %s206, %s207
      %p221 = scmp.eq.s32.totalorder %s26, 1
      %p222 = por %p220, %p221
      %p224 = scmp.ne.s32.totalorder %s207, %s223
      %p225 = scmp.eq.s32.totalorder %s26, 0
      %p226 = por %p224, %p225
      %p227 = scmp.le.s32.totalorder 1, %s20
      %p228 = scmp.lt.s32.totalorder %s20, 3
      %p229 = pnand %p227, %p228
      %p230 = pneg %p229
      // Predicated region
      $region9: #{tpu_custom_call.1} parent=5 // pred_check
        _
      $region10: #{tpu_custom_call.1} parent=5 // pred_check_branch
        %232 = sbr.rel (%p229) target = $region12
      $region11: #{tpu_custom_call.1} parent=5 // pred_region
        %s233 = ssub.s32 %s20, 1
        // Predicated region
        $region13: #{tpu_custom_call.1} parent=11 // pred_check
          %p234 = pneg %p67
        $region14: #{tpu_custom_call.1} parent=11 // pred_check_branch
          %236 = sbr.rel (%p234) target = $region16
        $region15: #{tpu_custom_call.1} parent=11 // pred_region
          _
        $region16: #{tpu_custom_call.1} parent=11 // pred_fallthru
          _
        // Predicated region
        $region17: #{tpu_custom_call.1} parent=11 // pred_check
          %p237 = pneg %p88
        $region18: #{tpu_custom_call.1} parent=11 // pred_check_branch
          %239 = sbr.rel (%p237) target = $region20
        $region19: #{tpu_custom_call.1} parent=11 // pred_region
          _
        $region20: #{tpu_custom_call.1} parent=11 // pred_fallthru
          _
        // Predicated region
        $region21: #{tpu_custom_call.1} parent=11 // pred_check
          %p240 = pneg %p109
        $region22: #{tpu_custom_call.1} parent=11 // pred_check_branch
          %242 = sbr.rel (%p240) target = $region24
        $region23: #{tpu_custom_call.1} parent=11 // pred_region
          _
        $region24: #{tpu_custom_call.1} parent=11 // pred_fallthru
          _
        // Predicated region
        $region25: #{tpu_custom_call.1} parent=11 // pred_check
          %p243 = pneg %p130
        $region26: #{tpu_custom_call.1} parent=11 // pred_check_branch
          %245 = sbr.rel (%p243) target = $region28
        $region27: #{tpu_custom_call.1} parent=11 // pred_region
          _
        $region28: #{tpu_custom_call.1} parent=11 // pred_fallthru
          _
        // Predicated region
        $region29: #{tpu_custom_call.1} parent=11 // pred_check
          %p246 = pneg %p151
        $region30: #{tpu_custom_call.1} parent=11 // pred_check_branch
          %248 = sbr.rel (%p246) target = $region32
        $region31: #{tpu_custom_call.1} parent=11 // pred_region
          _
        $region32: #{tpu_custom_call.1} parent=11 // pred_fallthru
          _
        // Predicated region
        $region33: #{tpu_custom_call.1} parent=11 // pred_check
          %p249 = pneg %p172
        $region34: #{tpu_custom_call.1} parent=11 // pred_check_branch
          %251 = sbr.rel (%p249) target = $region36
        $region35: #{tpu_custom_call.1} parent=11 // pred_region
          _
        $region36: #{tpu_custom_call.1} parent=11 // pred_fallthru
          _
        // Predicated region
        $region37: #{tpu_custom_call.1} parent=11 // pred_check
          %p252 = pneg %p193
        $region38: #{tpu_custom_call.1} parent=11 // pred_check_branch
          %254 = sbr.rel (%p252) target = $region40
        $region39: #{tpu_custom_call.1} parent=11 // pred_region
          _
        $region40: #{tpu_custom_call.1} parent=11 // pred_fallthru
          _
      $region12: #{tpu_custom_call.1} parent=5 // pred_fallthru
        _
      %p255 = scmp.lt.s32.totalorder %s20, 2
      // Predicated region
      $region41: #{tpu_custom_call.1} parent=5 // pred_check
        %p256 = pneg %p255
      $region42: #{tpu_custom_call.1} parent=5 // pred_check_branch
        %258 = sbr.rel (%p256) target = $region44
      $region43: #{tpu_custom_call.1} parent=5 // pred_region
        // Predicated region
        $region45: #{tpu_custom_call.1} parent=43 // pred_check
          %p259 = pneg %p40
        $region46: #{tpu_custom_call.1} parent=43 // pred_check_branch
          %261 = sbr.rel (%p259) target = $region48
        $region47: #{tpu_custom_call.1} parent=43 // pred_region
          %s262 = sand.u32 %s30, 1
          %s263 = scalar_lea.sflag [#allocation3], %s262
          %s264 = sand.u32 %s30, 1
          %s265 = smul.addr %s264, 32
          %s266 = scalar_lea.vmem [#allocation2], %s265
          %s268 = ssub.s32 512, 512
          %269 = vsyncadd %s263, %s268
          %s270 = smul.addr %s20, 4
          %s271 = smul.addr %s270, 128
          %s272 = scalar_lea.hbm %s0, %s271
          %s273 = sshll.u32 %s266, 4
          %s274 = int_to_ptr.vmem [resolvable:$true] %s273
          %279 = dma.hbm_to_vmem [thread:$0]  %s272, 512, %s274, %s263, 256, 256, 16
        $region48: #{tpu_custom_call.1} parent=43 // pred_fallthru
          _
      $region44: #{tpu_custom_call.1} parent=5 // pred_fallthru
        _
      %p280 = scmp.le.s32.totalorder 1, %s20
      %p281 = scmp.lt.s32.totalorder %s20, 3
      %p282 = pnand %p280, %p281
      %p283 = pneg %p282
      // Predicated region
      $region49: #{tpu_custom_call.1} parent=5 // pred_check
        _
      $region50: #{tpu_custom_call.1} parent=5 // pred_check_branch
        %285 = sbr.rel (%p282) target = $region52
      $region51: #{tpu_custom_call.1} parent=5 // pred_region
        %s286 = ssub.s32 %s20, 1
        %s287 = sand.u32 %s33, 1
        %s288 = scalar_lea.sflag [#allocation3], %s287
        %s289 = sand.u32 %s33, 1
        %s290 = smul.addr %s289, 32
        %s291 = scalar_lea.vmem [#allocation2], %s290
        // Predicated region
        $region53: #{tpu_custom_call.1} parent=51 // pred_check
          %p292 = pneg %p46
        $region54: #{tpu_custom_call.1} parent=51 // pred_check_branch
          %294 = sbr.rel (%p292) target = $region56
        $region55: #{tpu_custom_call.1} parent=51 // pred_region
          %295 = dma.done %s288, 512
        $region56: #{tpu_custom_call.1} parent=51 // pred_fallthru
          _
        %s296 = sand.u32 %s33, 1
        %s297 = scalar_lea.sflag [#allocation3], %s296
        %s298 = sand.u32 %s33, 1
        %s299 = smul.addr %s298, 32
        %s300 = scalar_lea.vmem [#allocation2], %s299
        %p301 = pneg %p46
        %p302 = pneg %p43
        %p303 = pneg %p67
        %p304 = pneg %p64
        %p305 = pneg %p88
        %p306 = pneg %p85
        %p307 = pneg %p109
        %p308 = pneg %p106
        %p309 = pneg %p130
        %p310 = pneg %p127
        %p311 = pneg %p151
        %p312 = pneg %p148
        %p313 = pneg %p172
        %p314 = pneg %p169
        %p315 = pneg %p193
        %p316 = pneg %p190
        %p317 = pneg %p219
        %p318 = pneg %p216
        %s319 = sand.u32 %s206, 1
        %s320 = scalar_lea.sflag [#allocation4], %s319
        %s321 = sand.u32 %s206, 1
        %s322 = smul.addr %s321, 32
        %s323 = scalar_lea.vmem [#allocation5], %s322
        %v324 = vld [vmem:[%s291] sm:$0xff]
        %v325 = vld [vmem:[%s291 + $0x8] sm:$0xff]
        %v326 = vld [vmem:[%s291 + $0x10] sm:$0xff]
        %v327 = vld [vmem:[%s291 + $0x18] sm:$0xff]
        %v328 = vld [vmem:[%s2] sm:$0xff]
        %v329 = vld [vmem:[%s3] sm:$0xff]
        %331 = vset.pattern.permute.xlu0 0
        %332 = vperm.xlu0 %331, %v329
        %v333 = vpop.permute.xlu0 %332
        %vm335 = vcmask 130048
        %v337 = vsel %vm335, %v328, 0
        %339 = vmatprep.subr.mxu0 0.0
        %340 = vmatpush1.msra.mxu0 0.0
        %341 = vmatprep.subr.mxu0 0.0
        %342 = vmatpush1.msra.mxu0 0.0
        %343 = vmatprep.subr.mxu0 0.0
        %344 = vmatpush1.msra.mxu0 0.0
        %345 = vmatprep.subr.mxu0 0.0
        %346 = vmatpush1.msra.mxu0 0.0
        %347 = vmatprep.subr.mxu0 0.0
        %348 = vmatpush1.msra.mxu0 0.0
        %349 = vmatprep.subr.mxu0 0.0
        %350 = vmatpush1.msra.mxu0 0.0
        %351 = vmatprep.subr.mxu0 0.0
        %352 = vmatpush1.msra.mxu0 0.0
        %353 = vmatprep.subr.mxu0 0.0
        %354 = vmatpush1.msra.mxu0 0.0
        %355 = vmatprep.subr.mxu0 0.0
        %356 = vmatpush1.msra.mxu0 0.0
        %357 = vmatprep.subr.mxu0 0.0
        %358 = vmatpush1.msra.mxu0 0.0
        %359 = vmatprep.subr.mxu0 0.0
        %360 = vmatpush1.msra.mxu0 0.0
        %361 = vmatprep.subr.mxu0 0.0
        %362 = vmatpush1.msra.mxu0 0.0
        %363 = vmatprep.subr.mxu0 0.0
        %364 = vmatpush1.msra.mxu0 0.0
        %365 = vmatprep.subr.mxu0 0.0
        %366 = vmatpush1.msra.mxu0 0.0
        %367 = vmatprep.subr.mxu0 %v327
        %368 = vmatpush1.msra.mxu0 %v326
        %369 = vmatprep.subr.mxu0 %v325
        %370 = vmatpush1.msra.mxu0 %v324
        %371 = vmatprep.subr.mxu0 0.0
        %372 = vmatpush2.msra.mxu0 0.0
        %373 = vmatprep.subr.mxu0 0.0
        %374 = vmatpush2.msra.mxu0 0.0
        %375 = vmatprep.subr.mxu0 0.0
        %376 = vmatpush2.msra.mxu0 0.0
        %377 = vmatprep.subr.mxu0 0.0
        %378 = vmatpush2.msra.mxu0 0.0
        %379 = vmatprep.subr.mxu0 0.0
        %380 = vmatpush2.msra.mxu0 0.0
        %381 = vmatprep.subr.mxu0 0.0
        %382 = vmatpush2.msra.mxu0 0.0
        %383 = vmatprep.subr.mxu0 0.0
        %384 = vmatpush2.msra.mxu0 0.0
        %385 = vmatprep.subr.mxu0 0.0
        %386 = vmatpush2.msra.mxu0 0.0
        %387 = vmatprep.subr.mxu0 0.0
        %388 = vmatpush2.msra.mxu0 0.0
        %389 = vmatprep.subr.mxu0 0.0
        %390 = vmatpush2.msra.mxu0 0.0
        %391 = vmatprep.subr.mxu0 0.0
        %392 = vmatpush2.msra.mxu0 0.0
        %393 = vmatprep.subr.mxu0 0.0
        %394 = vmatpush2.msra.mxu0 0.0
        %395 = vmatprep.subr.mxu0 0.0
        %396 = vmatpush2.msra.mxu0 0.0
        %397 = vmatprep.subr.mxu0 0.0
        %398 = vmatpush2.msra.mxu0 0.0
        %399 = vmatprep.subr.mxu0 0.0
        %400 = vmatpush2.msra.mxu0 0.0
        %401 = vmatprep.subr.mxu0 0.0
        %402 = vmatpush2.msra.mxu0 0.0
        %403 = vmatprep.mubr.f32.mxu0 0.0
        %404 = vmatmul.mubr.f32.gmra.mxu0 %v337
        %v405 = vpop.f32.mrf.mxu0
        %v406 = vadd.f32 %v333, %v405
        %v407 = vpop.f32.mrf.mxu0
        %v408 = vadd.f32 %v333, %v407
        %409 = vdwg.mxu0
        %v410 = vmax.f32 %v406, 0.0
        %v411 = vmax.f32 %v408, 0.0
        %412 = vrot.lane.b32.xlu0 %v410, 17
        %v413 = vpop.permute.xlu0 %412
        %414 = vrot.lane.b32.xlu0 %v411, 17
        %v415 = vpop.permute.xlu0 %414
        %v416 = vlaneseq
        %v417 = vand.u32 %v416, 127
        %vm418 = vcmp.lt.s32.totalorder %v417, 17
        %v419 = vsel %vm418, %v413, %v415
        %v420 = vsel %vm418, %v415, %v413
        %v421 = vld [vmem:[%s1] sm:$0x3]
        %v423 = vlaneseq
        %v424 = vshrl.u32 %v423, 7
        %v425 = vsub.s32 0, %v424
        %v426 = vrot.slane %v421, %v425
        %v427 = vlaneseq
        %v428 = vshrl.u32 %v427, 7
        %v429 = vsub.s32 1, %v428
        %v430 = vrot.slane %v421, %v429
        %v433 = vmul.f32 %v420, %v426
        %v434 = vmul.f32 %v419, %v430
        %435 = vrot.lane.b32.xlu0 %v410, 16
        %v436 = vpop.permute.xlu0 %435
        %437 = vrot.lane.b32.xlu0 %v411, 16
        %v438 = vpop.permute.xlu0 %437
        %vm439 = vcmp.lt.s32.totalorder %v417, 16
        %v440 = vsel %vm439, %v436, %v438
        %v441 = vsel %vm439, %v438, %v436
        %s442 = scalar_lea.vmem %s1, 2
        %v443 = vld [vmem:[%s442] sm:$0x3]
        %v445 = vlaneseq
        %v446 = vshrl.u32 %v445, 7
        %v447 = vsub.s32 0, %v446
        %v448 = vrot.slane %v443, %v447
        %v449 = vlaneseq
        %v450 = vshrl.u32 %v449, 7
        %v451 = vsub.s32 1, %v450
        %v452 = vrot.slane %v443, %v451
        %v455 = vmul.f32 %v441, %v448
        %v456 = vmul.f32 %v440, %v452
        %457 = vrot.lane.b32.xlu0 %v410, 15
        %v458 = vpop.permute.xlu0 %457
        %459 = vrot.lane.b32.xlu0 %v411, 15
        %v460 = vpop.permute.xlu0 %459
        %vm461 = vcmp.lt.s32.totalorder %v417, 15
        %v462 = vsel %vm461, %v458, %v460
        %v463 = vsel %vm461, %v460, %v458
        %s464 = scalar_lea.vmem %s1, 4
        %v465 = vld [vmem:[%s464] sm:$0x3]
        %v467 = vlaneseq
        %v468 = vshrl.u32 %v467, 7
        %v469 = vsub.s32 0, %v468
        %v470 = vrot.slane %v465, %v469
        %v471 = vlaneseq
        %v472 = vshrl.u32 %v471, 7
        %v473 = vsub.s32 1, %v472
        %v474 = vrot.slane %v465, %v473
        %v477 = vmul.f32 %v463, %v470
        %v478 = vmul.f32 %v462, %v474
        %479 = vrot.lane.b32.xlu0 %v410, 1
        %v480 = vpop.permute.xlu0 %479
        %481 = vrot.lane.b32.xlu0 %v411, 1
        %v482 = vpop.permute.xlu0 %481
        %vm483 = vcmp.lt.s32.totalorder %v417, 1
        %v484 = vsel %vm483, %v480, %v482
        %v485 = vsel %vm483, %v482, %v480
        %s486 = scalar_lea.vmem %s1, 6
        %v487 = vld [vmem:[%s486] sm:$0x3]
        %v489 = vlaneseq
        %v490 = vshrl.u32 %v489, 7
        %v491 = vsub.s32 0, %v490
        %v492 = vrot.slane %v487, %v491
        %v493 = vlaneseq
        %v494 = vshrl.u32 %v493, 7
        %v495 = vsub.s32 1, %v494
        %v496 = vrot.slane %v487, %v495
        %v499 = vmul.f32 %v485, %v492
        %v500 = vmul.f32 %v484, %v496
        %501 = vrot.lane.b32.xlu0 %v410, 127
        %v502 = vpop.permute.xlu0 %501
        %503 = vrot.lane.b32.xlu0 %v411, 127
        %v504 = vpop.permute.xlu0 %503
        %vm505 = vcmp.lt.s32.totalorder %v417, 127
        %v506 = vsel %vm505, %v502, %v504
        %v507 = vsel %vm505, %v504, %v502
        %s508 = scalar_lea.vmem %s1, 10
        %v509 = vld [vmem:[%s508] sm:$0x3]
        %v511 = vlaneseq
        %v512 = vshrl.u32 %v511, 7
        %v513 = vsub.s32 0, %v512
        %v514 = vrot.slane %v509, %v513
        %v515 = vlaneseq
        %v516 = vshrl.u32 %v515, 7
        %v517 = vsub.s32 1, %v516
        %v518 = vrot.slane %v509, %v517
        %v521 = vmul.f32 %v506, %v514
        %v522 = vmul.f32 %v507, %v518
        %523 = vrot.lane.b32.xlu0 %v410, 113
        %v524 = vpop.permute.xlu0 %523
        %525 = vrot.lane.b32.xlu0 %v411, 113
        %v526 = vpop.permute.xlu0 %525
        %vm527 = vcmp.lt.s32.totalorder %v417, 113
        %v528 = vsel %vm527, %v524, %v526
        %v529 = vsel %vm527, %v526, %v524
        %s530 = scalar_lea.vmem %s1, 12
        %v531 = vld [vmem:[%s530] sm:$0x3]
        %v533 = vlaneseq
        %v534 = vshrl.u32 %v533, 7
        %v535 = vsub.s32 0, %v534
        %v536 = vrot.slane %v531, %v535
        %v537 = vlaneseq
        %v538 = vshrl.u32 %v537, 7
        %v539 = vsub.s32 1, %v538
        %v540 = vrot.slane %v531, %v539
        %v543 = vmul.f32 %v528, %v536
        %v544 = vmul.f32 %v529, %v540
        %545 = vrot.lane.b32.xlu0 %v410, 112
        %v546 = vpop.permute.xlu0 %545
        %547 = vrot.lane.b32.xlu0 %v411, 112
        %v548 = vpop.permute.xlu0 %547
        %vm549 = vcmp.lt.s32.totalorder %v417, 112
        %v550 = vsel %vm549, %v546, %v548
        %v551 = vsel %vm549, %v548, %v546
        %s552 = scalar_lea.vmem %s1, 14
        %v553 = vld [vmem:[%s552] sm:$0x3]
        %v555 = vlaneseq
        %v556 = vshrl.u32 %v555, 7
        %v557 = vsub.s32 0, %v556
        %v558 = vrot.slane %v553, %v557
        %v559 = vlaneseq
        %v560 = vshrl.u32 %v559, 7
        %v561 = vsub.s32 1, %v560
        %v562 = vrot.slane %v553, %v561
        %v565 = vmul.f32 %v550, %v558
        %v566 = vmul.f32 %v551, %v562
        %567 = vrot.lane.b32.xlu0 %v410, 111
        %v568 = vpop.permute.xlu0 %567
        %569 = vrot.lane.b32.xlu0 %v411, 111
        %v570 = vpop.permute.xlu0 %569
        %vm571 = vcmp.lt.s32.totalorder %v417, 111
        %v572 = vsel %vm571, %v568, %v570
        %v573 = vsel %vm571, %v570, %v568
        %s574 = scalar_lea.vmem %s1, 16
        %v575 = vld [vmem:[%s574] sm:$0x3]
        %v577 = vlaneseq
        %v578 = vshrl.u32 %v577, 7
        %v579 = vsub.s32 0, %v578
        %v580 = vrot.slane %v575, %v579
        %v581 = vlaneseq
        %v582 = vshrl.u32 %v581, 7
        %v583 = vsub.s32 1, %v582
        %v584 = vrot.slane %v575, %v583
        %v587 = vmul.f32 %v572, %v580
        %v588 = vmul.f32 %v573, %v584
        %v589 = vld [vmem:[%s4] sm:$0xff]
        %v590 = vld [vmem:[%s5] sm:$0xff]
        %592 = vset.pattern.permute.xlu0 0
        %593 = vperm.xlu0 %592, %v590
        %v594 = vpop.permute.xlu0 %593
        %vm596 = vcmask 588800
        %v598 = vsel %vm596, %v589, 0
        %600 = vmatprep.subr.mxu0 0.0
        %601 = vmatpush1.msra.mxu0 0.0
        %602 = vmatprep.subr.mxu0 0.0
        %603 = vmatpush1.msra.mxu0 0.0
        %604 = vmatprep.subr.mxu0 0.0
        %605 = vmatpush1.msra.mxu0 0.0
        %606 = vmatprep.subr.mxu0 0.0
        %607 = vmatpush1.msra.mxu0 0.0
        %608 = vmatprep.subr.mxu0 0.0
        %609 = vmatpush1.msra.mxu0 0.0
        %610 = vmatprep.subr.mxu0 0.0
        %611 = vmatpush1.msra.mxu0 0.0
        %612 = vmatprep.subr.mxu0 0.0
        %613 = vmatpush1.msra.mxu0 0.0
        %614 = vmatprep.subr.mxu0 %v588
        %615 = vmatpush1.msra.mxu0 %v587
        %616 = vmatprep.subr.mxu0 %v566
        %617 = vmatpush1.msra.mxu0 %v565
        %618 = vmatprep.subr.mxu0 %v544
        %619 = vmatpush1.msra.mxu0 %v543
        %620 = vmatprep.subr.mxu0 %v522
        %621 = vmatpush1.msra.mxu0 %v521
        %622 = vmatprep.subr.mxu0 %v411
        %623 = vmatpush1.msra.mxu0 %v410
        %624 = vmatprep.subr.mxu0 %v500
        %625 = vmatpush1.msra.mxu0 %v499
        %626 = vmatprep.subr.mxu0 %v478
        %627 = vmatpush1.msra.mxu0 %v477
        %628 = vmatprep.subr.mxu0 %v456
        %629 = vmatpush1.msra.mxu0 %v455
        %630 = vmatprep.subr.mxu0 %v434
        %631 = vmatpush1.msra.mxu0 %v433
        %632 = vmatprep.subr.mxu0 0.0
        %633 = vmatpush2.msra.mxu0 0.0
        %634 = vmatprep.subr.mxu0 0.0
        %635 = vmatpush2.msra.mxu0 0.0
        %636 = vmatprep.subr.mxu0 0.0
        %637 = vmatpush2.msra.mxu0 0.0
        %638 = vmatprep.subr.mxu0 0.0
        %639 = vmatpush2.msra.mxu0 0.0
        %640 = vmatprep.subr.mxu0 0.0
        %641 = vmatpush2.msra.mxu0 0.0
        %642 = vmatprep.subr.mxu0 0.0
        %643 = vmatpush2.msra.mxu0 0.0
        %644 = vmatprep.subr.mxu0 0.0
        %645 = vmatpush2.msra.mxu0 0.0
        %646 = vmatprep.subr.mxu0 0.0
        %647 = vmatpush2.msra.mxu0 0.0
        %648 = vmatprep.subr.mxu0 0.0
        %649 = vmatpush2.msra.mxu0 0.0
        %650 = vmatprep.subr.mxu0 0.0
        %651 = vmatpush2.msra.mxu0 0.0
        %652 = vmatprep.subr.mxu0 0.0
        %653 = vmatpush2.msra.mxu0 0.0
        %654 = vmatprep.subr.mxu0 0.0
        %655 = vmatpush2.msra.mxu0 0.0
        %656 = vmatprep.subr.mxu0 0.0
        %657 = vmatpush2.msra.mxu0 0.0
        %658 = vmatprep.subr.mxu0 0.0
        %659 = vmatpush2.msra.mxu0 0.0
        %660 = vmatprep.subr.mxu0 0.0
        %661 = vmatpush2.msra.mxu0 0.0
        %662 = vmatprep.subr.mxu0 0.0
        %663 = vmatpush2.msra.mxu0 0.0
        %664 = vmatprep.mubr.f32.mxu0 0.0
        %665 = vmatmul.mubr.f32.gmra.mxu0 %v598
        %v666 = vpop.f32.mrf.mxu0
        %v667 = vadd.f32 %v594, %v666
        %v668 = vpop.f32.mrf.mxu0
        %v669 = vadd.f32 %v594, %v668
        %670 = vdwg.mxu0
        %v671 = vmax.f32 %v667, 0.0
        %v672 = vmax.f32 %v669, 0.0
        %v673 = vld [vmem:[%s6] sm:$0xff]
        %v674 = vld [vmem:[%s6 + $0x8] sm:$0xff]
        %v675 = vld [vmem:[%s7] sm:$0xff]
        %v676 = vld [vmem:[%s7 + $0x8] sm:$0xff]
        %678 = vset.pattern.permute.xlu0 0
        %679 = vperm.xlu0 %678, %v675
        %v680 = vpop.permute.xlu0 %679
        %683 = vset.pattern.permute.xlu0 0
        %684 = vperm.xlu0 %683, %v676
        %v685 = vpop.permute.xlu0 %684
        %vm687 = vcmask 64512
        %v689 = vsel %vm687, %v673, 0
        %v692 = vsel %vm687, %v674, 0
        %694 = vmatprep.subr.mxu0 0.0
        %695 = vmatpush1.msra.mxu0 0.0
        %696 = vmatprep.subr.mxu0 0.0
        %697 = vmatpush1.msra.mxu0 0.0
        %698 = vmatprep.subr.mxu0 0.0
        %699 = vmatpush1.msra.mxu0 0.0
        %700 = vmatprep.subr.mxu0 0.0
        %701 = vmatpush1.msra.mxu0 0.0
        %702 = vmatprep.subr.mxu0 0.0
        %703 = vmatpush1.msra.mxu0 0.0
        %704 = vmatprep.subr.mxu0 0.0
        %705 = vmatpush1.msra.mxu0 0.0
        %706 = vmatprep.subr.mxu0 0.0
        %707 = vmatpush1.msra.mxu0 0.0
        %708 = vmatprep.subr.mxu0 0.0
        %709 = vmatpush1.msra.mxu0 0.0
        %710 = vmatprep.subr.mxu0 0.0
        %711 = vmatpush1.msra.mxu0 0.0
        %712 = vmatprep.subr.mxu0 0.0
        %713 = vmatpush1.msra.mxu0 0.0
        %714 = vmatprep.subr.mxu0 0.0
        %715 = vmatpush1.msra.mxu0 0.0
        %716 = vmatprep.subr.mxu0 0.0
        %717 = vmatpush1.msra.mxu0 0.0
        %718 = vmatprep.subr.mxu0 0.0
        %719 = vmatpush1.msra.mxu0 0.0
        %720 = vmatprep.subr.mxu0 0.0
        %721 = vmatpush1.msra.mxu0 0.0
        %722 = vmatprep.subr.mxu0 0.0
        %723 = vmatpush1.msra.mxu0 0.0
        %724 = vmatprep.subr.mxu0 %v672
        %725 = vmatpush1.msra.mxu0 %v671
        %726 = vmatprep.subr.mxu0 0.0
        %727 = vmatpush2.msra.mxu0 0.0
        %728 = vmatprep.subr.mxu0 0.0
        %729 = vmatpush2.msra.mxu0 0.0
        %730 = vmatprep.subr.mxu0 0.0
        %731 = vmatpush2.msra.mxu0 0.0
        %732 = vmatprep.subr.mxu0 0.0
        %733 = vmatpush2.msra.mxu0 0.0
        %734 = vmatprep.subr.mxu0 0.0
        %735 = vmatpush2.msra.mxu0 0.0
        %736 = vmatprep.subr.mxu0 0.0
        %737 = vmatpush2.msra.mxu0 0.0
        %738 = vmatprep.subr.mxu0 0.0
        %739 = vmatpush2.msra.mxu0 0.0
        %740 = vmatprep.subr.mxu0 0.0
        %741 = vmatpush2.msra.mxu0 0.0
        %742 = vmatprep.subr.mxu0 0.0
        %743 = vmatpush2.msra.mxu0 0.0
        %744 = vmatprep.subr.mxu0 0.0
        %745 = vmatpush2.msra.mxu0 0.0
        %746 = vmatprep.subr.mxu0 0.0
        %747 = vmatpush2.msra.mxu0 0.0
        %748 = vmatprep.subr.mxu0 0.0
        %749 = vmatpush2.msra.mxu0 0.0
        %750 = vmatprep.subr.mxu0 0.0
        %751 = vmatpush2.msra.mxu0 0.0
        %752 = vmatprep.subr.mxu0 0.0
        %753 = vmatpush2.msra.mxu0 0.0
        %754 = vmatprep.subr.mxu0 0.0
        %755 = vmatpush2.msra.mxu0 0.0
        %756 = vmatprep.subr.mxu0 0.0
        %757 = vmatpush2.msra.mxu0 0.0
        %758 = vmatprep.mubr.f32.mxu0 0.0
        %759 = vmatmul.mubr.f32.gmra.mxu0 %v689
        %v760 = vpop.f32.mrf.mxu0
        %v761 = vadd.f32 %v680, %v760
        %v762 = vpop.f32.mrf.mxu0
        %v763 = vadd.f32 %v680, %v762
        %764 = vmatprep.mubr.f32.mxu0 0.0
        %765 = vmatmul.mubr.f32.gmra.mxu0 %v692
        %v766 = vpop.f32.mrf.mxu0
        %v767 = vadd.f32 %v685, %v766
        %v768 = vpop.f32.mrf.mxu0
        %v769 = vadd.f32 %v685, %v768
        %770 = vdwg.mxu0
        %v771 = vadd.f32 %v761, %v324
        %v772 = vadd.f32 %v763, %v325
        %v773 = vadd.f32 %v767, %v326
        %v774 = vadd.f32 %v769, %v327
        %v775 = vmax.f32 %v771, 0.0
        %v776 = vmax.f32 %v772, 0.0
        %v777 = vmax.f32 %v773, 0.0
        %v778 = vmax.f32 %v774, 0.0
        %779 = vst [vmem:[%s323] sm:$0xff] %v775
        %780 = vst [vmem:[%s323 + $0x8] sm:$0xff] %v776
        %781 = vst [vmem:[%s323 + $0x10] sm:$0xff] %v777
        %782 = vst [vmem:[%s323 + $0x18] sm:$0xff] %v778
        %s783 = sand.u32 %s206, 1
        %s784 = scalar_lea.sflag [#allocation4], %s783
        %s785 = sand.u32 %s206, 1
        %s786 = smul.addr %s785, 32
        %s787 = scalar_lea.vmem [#allocation5], %s786
        // Predicated region
        $region57: #{tpu_custom_call.1} parent=51 // pred_check
          %p788 = pneg %p216
        $region58: #{tpu_custom_call.1} parent=51 // pred_check_branch
          %790 = sbr.rel (%p788) target = $region60
        $region59: #{tpu_custom_call.1} parent=51 // pred_region
          %s792 = ssub.s32 512, 512
          %793 = vsyncadd %s784, %s792
          %s794 = smul.addr %s25, 4
          %s795 = smul.addr %s794, 128
          %s796 = scalar_lea.hbm %s8, %s795
          %s797 = sshll.u32 %s787, 4
          %s798 = int_to_ptr.vmem [resolvable:$true] %s797
          %803 = dma.vmem_to_hbm [thread:$0]  %s798, 512, %s796, %s784, 256, 256, 16
        $region60: #{tpu_custom_call.1} parent=51 // pred_fallthru
          _
      $region52: #{tpu_custom_call.1} parent=5 // pred_fallthru
        _
      %p804 = scmp.le.s32.totalorder 2, %s20
      // Predicated region
      $region61: #{tpu_custom_call.1} parent=5 // pred_check
        %p805 = pneg %p804
      $region62: #{tpu_custom_call.1} parent=5 // pred_check_branch
        %807 = sbr.rel (%p805) target = $region64
      $region63: #{tpu_custom_call.1} parent=5 // pred_region
        %s808 = ssub.s32 %s20, 2
        // Predicated region
        $region65: #{tpu_custom_call.1} parent=63 // pred_check
          %p809 = pneg %p222
        $region66: #{tpu_custom_call.1} parent=63 // pred_check_branch
          %811 = sbr.rel (%p809) target = $region68
        $region67: #{tpu_custom_call.1} parent=63 // pred_region
          %s812 = sand.u32 %s207, 1
          %s813 = scalar_lea.sflag [#allocation4], %s812
          %s814 = sand.u32 %s207, 1
          %s815 = smul.addr %s814, 32
          %s816 = scalar_lea.vmem [#allocation5], %s815
          %817 = dma.done %s813, 512
        $region68: #{tpu_custom_call.1} parent=63 // pred_fallthru
          _
      $region64: #{tpu_custom_call.1} parent=5 // pred_fallthru
        _
    $region6: #{tpu_custom_call.1} parent=1 // loop_footer
      %s24 = sadd.s32 1, %s20
    $region7: #{tpu_custom_call.1} parent=1 // loop_footer_branch
      %19 = sbr.rel target = $region3
    $region8: #{tpu_custom_call.1} parent=1 // loop_exit
      _
    %818 = vsyncpa [#allocation3], 1
    %s819 = scalar_lea.sflag [#allocation3], 1
    %820 = vsyncpa %s819, 1
    %821 = vsyncpa [#allocation4], 1
    %s822 = scalar_lea.sflag [#allocation4], 1
    %823 = vsyncpa %s822, 1

</llo_original>
